<compile_context>
chip_gen: v5e
topology: v5e:2x2
jax: 0.10.0
libtpu: 0.0.40
codegen_flags: <defaults>
</compile_context>

<pallas_src>
import math

import jax
import jax.numpy as jnp
from jax.experimental import pallas as pl
from jax.experimental.pallas import tpu as pltpu  # noqa: F401  (TPU backend assumed)

# ----- problem sizes (small, consistent with the module) -----
BATCH = 2
SEQ = 8
D_MODEL = 32
NUM_HEADS = 4
HEAD_DIM = D_MODEL // NUM_HEADS   # 8
HALF = HEAD_DIM // 2              # 4
ROWS = BATCH * SEQ                # 16

# ----- parameter-slab layout (all row offsets 8-aligned) -----
X_COLS = 40                       # x (32) | ones (1) | zero pad (7)
ROW_WQKV = 0                      # 40 rows:  W_qkv (32) | b_qkv (1) | zeros (7), lanes 0:96
ROW_ROT = 40                      # 64 rows:  block-diag rotate_half matrix, lanes 0:64
ROW_WOUT = 104                    # 32 rows:  W_out, lanes 0:32
ROW_BOUT = 136                    # 1 row:    b_out, lanes 0:32   (rows 137:144 zero pad)
ROW_COS = 144                     # 16 rows:  cos table, lanes 0:64 (q lanes pre-scaled)
ROW_SIN = 160                     # 16 rows:  sin table, lanes 0:64 (q lanes pre-scaled)
PARAM_ROWS = 176
PARAM_COLS = 96


def mha_rope_kernel(x_ref, p_ref, o_ref):
    # x_ref: (16, 40)   = [x | 1 | 0]   (bias folded into the matmul via the ones column)
    # p_ref: (176, 96)  = packed constant parameter slab (see layout above)
    # o_ref: (16, 32)
    x = x_ref[...]

    # --- fused QKV projection + bias: one MXU push for the whole flattened batch ---
    qkv = jnp.dot(x, p_ref[ROW_WQKV:ROW_WQKV + X_COLS, :],
                  preferred_element_type=jnp.float32)             # (16, 96)

    # --- RoPE on the combined (q|k) slab: rotate_half folded into a constant matmul ---
    qk = qkv[:, :2 * D_MODEL]                                     # (16, 64)
    rot = jnp.dot(qk, p_ref[ROW_ROT:ROW_ROT + 2 * D_MODEL, :2 * D_MODEL],
                  preferred_element_type=jnp.float32)             # per-head rotate_half(qk)
    cos_t = p_ref[ROW_COS:ROW_COS + ROWS, :2 * D_MODEL]           # (16, 64), sublane slices
    sin_t = p_ref[ROW_SIN:ROW_SIN + ROWS, :2 * D_MODEL]
    qk_rope = qk * cos_t + rot * sin_t                            # q lanes already /sqrt(hd)

    # --- hoisted output-projection params ---
    w_out = p_ref[ROW_WOUT:ROW_WOUT + D_MODEL, :D_MODEL]          # (32, 32)
    b_out = p_ref[ROW_BOUT:ROW_BOUT + 1, :D_MODEL]                # (1, 32)

    # --- per-(batch, head) attention on 2-D tiles, per-head accumulation into out-proj ---
    outs = []
    for b in range(BATCH):
        rs = slice(b * SEQ, (b + 1) * SEQ)
        acc = None
        for h in range(NUM_HEADS):
            c0 = h * HEAD_DIM
            q_bh = qk_rope[rs, c0:c0 + HEAD_DIM]                          # (8, 8)
            k_bh = qk_rope[rs, D_MODEL + c0:D_MODEL + c0 + HEAD_DIM]      # (8, 8)
            v_bh = qkv[rs, 2 * D_MODEL + c0:2 * D_MODEL + c0 + HEAD_DIM]  # (8, 8)

            s = jnp.dot(q_bh, k_bh.T, preferred_element_type=jnp.float32)  # (8, 8)
            m = jnp.max(s, axis=-1, keepdims=True)
            p = jnp.exp(s - m)
            denom = jnp.sum(p, axis=-1, keepdims=True)
            p = p * pl.reciprocal(denom, approx=True)             # EUP vrcp (separate slot)
            attn_bh = jnp.dot(p, v_bh, preferred_element_type=jnp.float32)

            contrib = jnp.dot(attn_bh, w_out[c0:c0 + HEAD_DIM, :],
                              preferred_element_type=jnp.float32)
            acc = contrib if acc is None else acc + contrib
        outs.append(acc + b_out)

    # single full-ref store (one write instead of two masked per-batch stores)
    o_ref[...] = jnp.concatenate(outs, axis=0)


def rotary_tables(seq_len, head_dim):
    """Precompute sin/cos tables exactly as RotaryPositionalEmbedding does."""
    inv_freq = 1.0 / (10000.0 ** (jnp.arange(0, head_dim, 2, dtype=jnp.float32) / head_dim))
    t = jnp.arange(seq_len, dtype=jnp.float32)
    freqs = jnp.einsum("i,j->ij", t, inv_freq)            # (seq, head_dim//2)
    emb = jnp.concatenate([freqs, freqs], axis=-1)         # (seq, head_dim)
    return jnp.sin(emb), jnp.cos(emb)


def build_params(w_qkv, b_qkv, w_out, b_out, sin8, cos8):
    """Pack all constant operands into one (176, 96) slab (built once, outside hot path)."""
    def pad_to(a, rows, cols):
        return jnp.pad(a, ((0, rows - a.shape[0]), (0, cols - a.shape[1])))

    # Head-tiled cos/sin covering the concatenated q|k slab (2*D_MODEL lanes),
    # with the 1/sqrt(head_dim) attention scale folded into the q lanes.
    reps = (BATCH, 2 * D_MODEL // HEAD_DIM)                # (2, 8): (8,8) -> (16, 64)
    cos_t = jnp.tile(cos8, reps)
    sin_t = jnp.tile(sin8, reps)
    lane = jnp.arange(2 * D_MODEL)
    q_scale = jnp.where(lane < D_MODEL, 1.0 / math.sqrt(HEAD_DIM), 1.0).astype(jnp.float32)
    cos_t = cos_t * q_scale
    sin_t = sin_t * q_scale

    # Constant per-head rotate_half matrix: block-diagonal [[0, I], [-I, 0]].
    eye = jnp.eye(HALF, dtype=jnp.float32)
    zero = jnp.zeros((HALF, HALF), dtype=jnp.float32)
    blk = jnp.block([[zero, eye], [-eye, zero]])                        # (8, 8)
    rot_mat = jnp.kron(jnp.eye(2 * NUM_HEADS, dtype=jnp.float32), blk)  # (64, 64)

    slab = jnp.concatenate([
        pad_to(jnp.concatenate([w_qkv, b_qkv], axis=0), 40, PARAM_COLS),   # rows   0:40
        pad_to(rot_mat, 64, PARAM_COLS),                                   # rows  40:104
        pad_to(jnp.concatenate([w_out, b_out], axis=0), 40, PARAM_COLS),   # rows 104:144
        pad_to(cos_t, 16, PARAM_COLS),                                     # rows 144:160
        pad_to(sin_t, 16, PARAM_COLS),                                     # rows 160:176
    ], axis=0)
    return slab.astype(jnp.float32)


def mha_with_rope(x, params):
    """x: (BATCH, SEQ, D_MODEL) f32, params: (176, 96) f32 -> (BATCH, SEQ, D_MODEL) f32."""
    x_flat = x.reshape(ROWS, D_MODEL)
    ones = jnp.ones((ROWS, 1), x_flat.dtype)
    zpad = jnp.zeros((ROWS, X_COLS - D_MODEL - 1), x_flat.dtype)
    x_aug = jnp.concatenate([x_flat, ones, zpad], axis=-1)         # (16, 40)

    out_flat = pl.pallas_call(
        mha_rope_kernel,
        out_shape=jax.ShapeDtypeStruct((ROWS, D_MODEL), jnp.float32),
        # No grid: everything (~70 KiB) lives in VMEM for a single invocation.
    )(x_aug, params)
    return out_flat.reshape(BATCH, SEQ, D_MODEL)


def reference_mha_rope(x, w_qkv, b_qkv, w_out, b_out, sin_emb, cos_emb):
    """Plain-JAX reference mirroring the PyTorch forward (mask=None)."""
    B, S, D = x.shape
    qkv = x @ w_qkv + b_qkv[0]
    q, k, v = jnp.split(qkv, 3, axis=-1)

    def to_heads(t):
        return t.reshape(B, S, NUM_HEADS, HEAD_DIM).transpose(0, 2, 1, 3)

    q, k, v = to_heads(q), to_heads(k), to_heads(v)

    def rope(t):
        half = HEAD_DIM // 2
        t1, t2 = t[..., :half], t[..., half:]
        rot = jnp.concatenate([-t2, t1], axis=-1)
        return t * cos_emb[None, None] + rot * sin_emb[None, None]

    q, k = rope(q), rope(k)
    scores = jnp.einsum("bhqd,bhkd->bhqk", q, k) / math.sqrt(HEAD_DIM)
    attn = jax.nn.softmax(scores, axis=-1)
    out = jnp.einsum("bhqk,bhkd->bhqd", attn, v)
    out = out.transpose(0, 2, 1, 3).reshape(B, S, D)
    return out @ w_out + b_out[0]


if __name__ == "__main__":
    key = jax.random.PRNGKey(0)
    kx, k1, k2, k3, k4 = jax.random.split(key, 5)

    # Deterministic synthetic parameters (nn.Linear shapes, stored as (in, out)).
    x = jax.random.normal(kx, (BATCH, SEQ, D_MODEL), dtype=jnp.float32)
    w_qkv = jax.random.normal(k1, (D_MODEL, 3 * D_MODEL), dtype=jnp.float32) * 0.05
    b_qkv = jax.random.normal(k2, (1, 3 * D_MODEL), dtype=jnp.float32) * 0.05
    w_out = jax.random.normal(k3, (D_MODEL, D_MODEL), dtype=jnp.float32) * 0.05
    b_out = jax.random.normal(k4, (1, D_MODEL), dtype=jnp.float32) * 0.05

    sin_emb, cos_emb = rotary_tables(SEQ, HEAD_DIM)
    params = build_params(w_qkv, b_qkv, w_out, b_out, sin_emb, cos_emb)  # built once

    out = mha_with_rope(x, params)
    out = jax.block_until_ready(out)

    ref = reference_mha_rope(x, w_qkv, b_qkv, w_out, b_out, sin_emb, cos_emb)
    assert out.shape == (BATCH, SEQ, D_MODEL)
    # Tolerance 1e-3: the softmax denominator uses the approximate EUP reciprocal
    # (~1e-4 relative error), per the perf review; flag if bit-parity is required.
    assert jnp.allclose(out, ref, atol=1e-3, rtol=1e-3), "mismatch vs reference"

    print("KERNEL_OK")
</pallas_src>

<mosaic_0001>
module attributes {stable_mosaic.version = 11 : i64} {
  func.func @mha_rope_kernel(%arg0: memref<16x40xf32, #tpu.memory_space<vmem>>, %arg1: memref<176x96xf32, #tpu.memory_space<vmem>>, %arg2: memref<16x32xf32, #tpu.memory_space<vmem>>) attributes {dimension_semantics = [], scalar_prefetch = 0 : i64, scratch_operands = 0 : i64, tpu.core_type = #tpu.core_type<tc>} {
    %c0 = arith.constant 0 : index
    %c0_0 = arith.constant 0 : index
    %0 = vector.load %arg0[%c0, %c0_0] : memref<16x40xf32, #tpu.memory_space<vmem>>, vector<16x40xf32>
    %c0_1 = arith.constant 0 : index
    %c0_2 = arith.constant 0 : index
    %1 = vector.load %arg1[%c0_1, %c0_2] : memref<176x96xf32, #tpu.memory_space<vmem>>, vector<40x96xf32>
    %cst = arith.constant dense<0.000000e+00> : vector<16x96xf32>
    %2 = tpu.matmul %0, %1, %cst {dimension_numbers = #tpu.dot_dimension_numbers<[1], [0], [0], [1], [0, 0, 1, 1], [], []>} : vector<16x40xf32>, vector<40x96xf32>, vector<16x96xf32> -> vector<16x96xf32>
    %3 = vector.extract_strided_slice %2 {offsets = [0, 0], sizes = [16, 64], strides = [1, 1]} : vector<16x96xf32> to vector<16x64xf32>
    %c40 = arith.constant 40 : index
    %c0_3 = arith.constant 0 : index
    %4 = vector.load %arg1[%c40, %c0_3] : memref<176x96xf32, #tpu.memory_space<vmem>>, vector<64x64xf32>
    %cst_4 = arith.constant dense<0.000000e+00> : vector<16x64xf32>
    %5 = tpu.matmul %3, %4, %cst_4 {dimension_numbers = #tpu.dot_dimension_numbers<[1], [0], [0], [1], [0, 0, 1, 1], [], []>} : vector<16x64xf32>, vector<64x64xf32>, vector<16x64xf32> -> vector<16x64xf32>
    %c144 = arith.constant 144 : index
    %c0_5 = arith.constant 0 : index
    %6 = vector.load %arg1[%c144, %c0_5] : memref<176x96xf32, #tpu.memory_space<vmem>>, vector<16x64xf32>
    %c160 = arith.constant 160 : index
    %c0_6 = arith.constant 0 : index
    %7 = vector.load %arg1[%c160, %c0_6] : memref<176x96xf32, #tpu.memory_space<vmem>>, vector<16x64xf32>
    %8 = arith.mulf %3, %6 : vector<16x64xf32>
    %9 = arith.mulf %5, %7 : vector<16x64xf32>
    %10 = arith.addf %8, %9 : vector<16x64xf32>
    %c104 = arith.constant 104 : index
    %c0_7 = arith.constant 0 : index
    %11 = vector.load %arg1[%c104, %c0_7] : memref<176x96xf32, #tpu.memory_space<vmem>>, vector<32x32xf32>
    %c136 = arith.constant 136 : index
    %c0_8 = arith.constant 0 : index
    %12 = vector.load %arg1[%c136, %c0_8] : memref<176x96xf32, #tpu.memory_space<vmem>>, vector<1x32xf32>
    %13 = vector.extract_strided_slice %10 {offsets = [0, 0], sizes = [8, 8], strides = [1, 1]} : vector<16x64xf32> to vector<8x8xf32>
    %14 = vector.extract_strided_slice %10 {offsets = [0, 32], sizes = [8, 8], strides = [1, 1]} : vector<16x64xf32> to vector<8x8xf32>
    %15 = vector.extract_strided_slice %2 {offsets = [0, 64], sizes = [8, 8], strides = [1, 1]} : vector<16x96xf32> to vector<8x8xf32>
    %16 = tpu.transpose %14, [1, 0] : vector<8x8xf32> -> vector<8x8xf32>
    %cst_9 = arith.constant dense<0.000000e+00> : vector<8x8xf32>
    %17 = tpu.matmul %13, %16, %cst_9 {dimension_numbers = #tpu.dot_dimension_numbers<[1], [0], [0], [1], [0, 0, 1, 1], [], []>} : vector<8x8xf32>, vector<8x8xf32>, vector<8x8xf32> -> vector<8x8xf32>
    %cst_10 = arith.constant dense<0xFF800000> : vector<8xf32>
    %18 = vector.multi_reduction <maximumf>, %17, %cst_10 [1] : vector<8x8xf32> to vector<8xf32>
    %19 = vector.shape_cast %18 : vector<8xf32> to vector<8x1xf32>
    %20 = vector.broadcast %19 : vector<8x1xf32> to vector<8x8xf32>
    %21 = arith.subf %17, %20 : vector<8x8xf32>
    %22 = math.exp %21 : vector<8x8xf32>
    %cst_11 = arith.constant dense<0.000000e+00> : vector<8xf32>
    %23 = vector.multi_reduction <add>, %22, %cst_11 [1] : vector<8x8xf32> to vector<8xf32>
    %24 = vector.shape_cast %23 : vector<8xf32> to vector<8x1xf32>
    %25 = tpu.reciprocal %24 {approx = true} : vector<8x1xf32> -> vector<8x1xf32>
    %26 = vector.broadcast %25 : vector<8x1xf32> to vector<8x8xf32>
    %27 = arith.mulf %22, %26 : vector<8x8xf32>
    %cst_12 = arith.constant dense<0.000000e+00> : vector<8x8xf32>
    %28 = tpu.matmul %27, %15, %cst_12 {dimension_numbers = #tpu.dot_dimension_numbers<[1], [0], [0], [1], [0, 0, 1, 1], [], []>} : vector<8x8xf32>, vector<8x8xf32>, vector<8x8xf32> -> vector<8x8xf32>
    %29 = vector.extract_strided_slice %11 {offsets = [0, 0], sizes = [8, 32], strides = [1, 1]} : vector<32x32xf32> to vector<8x32xf32>
    %cst_13 = arith.constant dense<0.000000e+00> : vector<8x32xf32>
    %30 = tpu.matmul %28, %29, %cst_13 {dimension_numbers = #tpu.dot_dimension_numbers<[1], [0], [0], [1], [0, 0, 1, 1], [], []>} : vector<8x8xf32>, vector<8x32xf32>, vector<8x32xf32> -> vector<8x32xf32>
    %31 = vector.extract_strided_slice %10 {offsets = [0, 8], sizes = [8, 8], strides = [1, 1]} : vector<16x64xf32> to vector<8x8xf32>
    %32 = vector.extract_strided_slice %10 {offsets = [0, 40], sizes = [8, 8], strides = [1, 1]} : vector<16x64xf32> to vector<8x8xf32>
    %33 = vector.extract_strided_slice %2 {offsets = [0, 72], sizes = [8, 8], strides = [1, 1]} : vector<16x96xf32> to vector<8x8xf32>
    %34 = tpu.transpose %32, [1, 0] : vector<8x8xf32> -> vector<8x8xf32>
    %cst_14 = arith.constant dense<0.000000e+00> : vector<8x8xf32>
    %35 = tpu.matmul %31, %34, %cst_14 {dimension_numbers = #tpu.dot_dimension_numbers<[1], [0], [0], [1], [0, 0, 1, 1], [], []>} : vector<8x8xf32>, vector<8x8xf32>, vector<8x8xf32> -> vector<8x8xf32>
    %cst_15 = arith.constant dense<0xFF800000> : vector<8xf32>
    %36 = vector.multi_reduction <maximumf>, %35, %cst_15 [1] : vector<8x8xf32> to vector<8xf32>
    %37 = vector.shape_cast %36 : vector<8xf32> to vector<8x1xf32>
    %38 = vector.broadcast %37 : vector<8x1xf32> to vector<8x8xf32>
    %39 = arith.subf %35, %38 : vector<8x8xf32>
    %40 = math.exp %39 : vector<8x8xf32>
    %cst_16 = arith.constant dense<0.000000e+00> : vector<8xf32>
    %41 = vector.multi_reduction <add>, %40, %cst_16 [1] : vector<8x8xf32> to vector<8xf32>
    %42 = vector.shape_cast %41 : vector<8xf32> to vector<8x1xf32>
    %43 = tpu.reciprocal %42 {approx = true} : vector<8x1xf32> -> vector<8x1xf32>
    %44 = vector.broadcast %43 : vector<8x1xf32> to vector<8x8xf32>
    %45 = arith.mulf %40, %44 : vector<8x8xf32>
    %cst_17 = arith.constant dense<0.000000e+00> : vector<8x8xf32>
    %46 = tpu.matmul %45, %33, %cst_17 {dimension_numbers = #tpu.dot_dimension_numbers<[1], [0], [0], [1], [0, 0, 1, 1], [], []>} : vector<8x8xf32>, vector<8x8xf32>, vector<8x8xf32> -> vector<8x8xf32>
    %47 = vector.extract_strided_slice %11 {offsets = [8, 0], sizes = [8, 32], strides = [1, 1]} : vector<32x32xf32> to vector<8x32xf32>
    %cst_18 = arith.constant dense<0.000000e+00> : vector<8x32xf32>
    %48 = tpu.matmul %46, %47, %cst_18 {dimension_numbers = #tpu.dot_dimension_numbers<[1], [0], [0], [1], [0, 0, 1, 1], [], []>} : vector<8x8xf32>, vector<8x32xf32>, vector<8x32xf32> -> vector<8x32xf32>
    %49 = arith.addf %30, %48 : vector<8x32xf32>
    %50 = vector.extract_strided_slice %10 {offsets = [0, 16], sizes = [8, 8], strides = [1, 1]} : vector<16x64xf32> to vector<8x8xf32>
    %51 = vector.extract_strided_slice %10 {offsets = [0, 48], sizes = [8, 8], strides = [1, 1]} : vector<16x64xf32> to vector<8x8xf32>
    %52 = vector.extract_strided_slice %2 {offsets = [0, 80], sizes = [8, 8], strides = [1, 1]} : vector<16x96xf32> to vector<8x8xf32>
    %53 = tpu.transpose %51, [1, 0] : vector<8x8xf32> -> vector<8x8xf32>
    %cst_19 = arith.constant dense<0.000000e+00> : vector<8x8xf32>
    %54 = tpu.matmul %50, %53, %cst_19 {dimension_numbers = #tpu.dot_dimension_numbers<[1], [0], [0], [1], [0, 0, 1, 1], [], []>} : vector<8x8xf32>, vector<8x8xf32>, vector<8x8xf32> -> vector<8x8xf32>
    %cst_20 = arith.constant dense<0xFF800000> : vector<8xf32>
    %55 = vector.multi_reduction <maximumf>, %54, %cst_20 [1] : vector<8x8xf32> to vector<8xf32>
    %56 = vector.shape_cast %55 : vector<8xf32> to vector<8x1xf32>
    %57 = vector.broadcast %56 : vector<8x1xf32> to vector<8x8xf32>
    %58 = arith.subf %54, %57 : vector<8x8xf32>
    %59 = math.exp %58 : vector<8x8xf32>
    %cst_21 = arith.constant dense<0.000000e+00> : vector<8xf32>
    %60 = vector.multi_reduction <add>, %59, %cst_21 [1] : vector<8x8xf32> to vector<8xf32>
    %61 = vector.shape_cast %60 : vector<8xf32> to vector<8x1xf32>
    %62 = tpu.reciprocal %61 {approx = true} : vector<8x1xf32> -> vector<8x1xf32>
    %63 = vector.broadcast %62 : vector<8x1xf32> to vector<8x8xf32>
    %64 = arith.mulf %59, %63 : vector<8x8xf32>
    %cst_22 = arith.constant dense<0.000000e+00> : vector<8x8xf32>
    %65 = tpu.matmul %64, %52, %cst_22 {dimension_numbers = #tpu.dot_dimension_numbers<[1], [0], [0], [1], [0, 0, 1, 1], [], []>} : vector<8x8xf32>, vector<8x8xf32>, vector<8x8xf32> -> vector<8x8xf32>
    %66 = vector.extract_strided_slice %11 {offsets = [16, 0], sizes = [8, 32], strides = [1, 1]} : vector<32x32xf32> to vector<8x32xf32>
    %cst_23 = arith.constant dense<0.000000e+00> : vector<8x32xf32>
    %67 = tpu.matmul %65, %66, %cst_23 {dimension_numbers = #tpu.dot_dimension_numbers<[1], [0], [0], [1], [0, 0, 1, 1], [], []>} : vector<8x8xf32>, vector<8x32xf32>, vector<8x32xf32> -> vector<8x32xf32>
    %68 = arith.addf %49, %67 : vector<8x32xf32>
    %69 = vector.extract_strided_slice %10 {offsets = [0, 24], sizes = [8, 8], strides = [1, 1]} : vector<16x64xf32> to vector<8x8xf32>
    %70 = vector.extract_strided_slice %10 {offsets = [0, 56], sizes = [8, 8], strides = [1, 1]} : vector<16x64xf32> to vector<8x8xf32>
    %71 = vector.extract_strided_slice %2 {offsets = [0, 88], sizes = [8, 8], strides = [1, 1]} : vector<16x96xf32> to vector<8x8xf32>
    %72 = tpu.transpose %70, [1, 0] : vector<8x8xf32> -> vector<8x8xf32>
    %cst_24 = arith.constant dense<0.000000e+00> : vector<8x8xf32>
    %73 = tpu.matmul %69, %72, %cst_24 {dimension_numbers = #tpu.dot_dimension_numbers<[1], [0], [0], [1], [0, 0, 1, 1], [], []>} : vector<8x8xf32>, vector<8x8xf32>, vector<8x8xf32> -> vector<8x8xf32>
    %cst_25 = arith.constant dense<0xFF800000> : vector<8xf32>
    %74 = vector.multi_reduction <maximumf>, %73, %cst_25 [1] : vector<8x8xf32> to vector<8xf32>
    %75 = vector.shape_cast %74 : vector<8xf32> to vector<8x1xf32>
    %76 = vector.broadcast %75 : vector<8x1xf32> to vector<8x8xf32>
    %77 = arith.subf %73, %76 : vector<8x8xf32>
    %78 = math.exp %77 : vector<8x8xf32>
    %cst_26 = arith.constant dense<0.000000e+00> : vector<8xf32>
    %79 = vector.multi_reduction <add>, %78, %cst_26 [1] : vector<8x8xf32> to vector<8xf32>
    %80 = vector.shape_cast %79 : vector<8xf32> to vector<8x1xf32>
    %81 = tpu.reciprocal %80 {approx = true} : vector<8x1xf32> -> vector<8x1xf32>
    %82 = vector.broadcast %81 : vector<8x1xf32> to vector<8x8xf32>
    %83 = arith.mulf %78, %82 : vector<8x8xf32>
    %cst_27 = arith.constant dense<0.000000e+00> : vector<8x8xf32>
    %84 = tpu.matmul %83, %71, %cst_27 {dimension_numbers = #tpu.dot_dimension_numbers<[1], [0], [0], [1], [0, 0, 1, 1], [], []>} : vector<8x8xf32>, vector<8x8xf32>, vector<8x8xf32> -> vector<8x8xf32>
    %85 = vector.extract_strided_slice %11 {offsets = [24, 0], sizes = [8, 32], strides = [1, 1]} : vector<32x32xf32> to vector<8x32xf32>
    %cst_28 = arith.constant dense<0.000000e+00> : vector<8x32xf32>
    %86 = tpu.matmul %84, %85, %cst_28 {dimension_numbers = #tpu.dot_dimension_numbers<[1], [0], [0], [1], [0, 0, 1, 1], [], []>} : vector<8x8xf32>, vector<8x32xf32>, vector<8x32xf32> -> vector<8x32xf32>
    %87 = arith.addf %68, %86 : vector<8x32xf32>
    %88 = vector.broadcast %12 : vector<1x32xf32> to vector<8x32xf32>
    %89 = arith.addf %87, %88 : vector<8x32xf32>
    %90 = vector.extract_strided_slice %10 {offsets = [8, 0], sizes = [8, 8], strides = [1, 1]} : vector<16x64xf32> to vector<8x8xf32>
    %91 = vector.extract_strided_slice %10 {offsets = [8, 32], sizes = [8, 8], strides = [1, 1]} : vector<16x64xf32> to vector<8x8xf32>
    %92 = vector.extract_strided_slice %2 {offsets = [8, 64], sizes = [8, 8], strides = [1, 1]} : vector<16x96xf32> to vector<8x8xf32>
    %93 = tpu.transpose %91, [1, 0] : vector<8x8xf32> -> vector<8x8xf32>
    %cst_29 = arith.constant dense<0.000000e+00> : vector<8x8xf32>
    %94 = tpu.matmul %90, %93, %cst_29 {dimension_numbers = #tpu.dot_dimension_numbers<[1], [0], [0], [1], [0, 0, 1, 1], [], []>} : vector<8x8xf32>, vector<8x8xf32>, vector<8x8xf32> -> vector<8x8xf32>
    %cst_30 = arith.constant dense<0xFF800000> : vector<8xf32>
    %95 = vector.multi_reduction <maximumf>, %94, %cst_30 [1] : vector<8x8xf32> to vector<8xf32>
    %96 = vector.shape_cast %95 : vector<8xf32> to vector<8x1xf32>
    %97 = vector.broadcast %96 : vector<8x1xf32> to vector<8x8xf32>
    %98 = arith.subf %94, %97 : vector<8x8xf32>
    %99 = math.exp %98 : vector<8x8xf32>
    %cst_31 = arith.constant dense<0.000000e+00> : vector<8xf32>
    %100 = vector.multi_reduction <add>, %99, %cst_31 [1] : vector<8x8xf32> to vector<8xf32>
    %101 = vector.shape_cast %100 : vector<8xf32> to vector<8x1xf32>
    %102 = tpu.reciprocal %101 {approx = true} : vector<8x1xf32> -> vector<8x1xf32>
    %103 = vector.broadcast %102 : vector<8x1xf32> to vector<8x8xf32>
    %104 = arith.mulf %99, %103 : vector<8x8xf32>
    %cst_32 = arith.constant dense<0.000000e+00> : vector<8x8xf32>
    %105 = tpu.matmul %104, %92, %cst_32 {dimension_numbers = #tpu.dot_dimension_numbers<[1], [0], [0], [1], [0, 0, 1, 1], [], []>} : vector<8x8xf32>, vector<8x8xf32>, vector<8x8xf32> -> vector<8x8xf32>
    %106 = vector.extract_strided_slice %11 {offsets = [0, 0], sizes = [8, 32], strides = [1, 1]} : vector<32x32xf32> to vector<8x32xf32>
    %cst_33 = arith.constant dense<0.000000e+00> : vector<8x32xf32>
    %107 = tpu.matmul %105, %106, %cst_33 {dimension_numbers = #tpu.dot_dimension_numbers<[1], [0], [0], [1], [0, 0, 1, 1], [], []>} : vector<8x8xf32>, vector<8x32xf32>, vector<8x32xf32> -> vector<8x32xf32>
    %108 = vector.extract_strided_slice %10 {offsets = [8, 8], sizes = [8, 8], strides = [1, 1]} : vector<16x64xf32> to vector<8x8xf32>
    %109 = vector.extract_strided_slice %10 {offsets = [8, 40], sizes = [8, 8], strides = [1, 1]} : vector<16x64xf32> to vector<8x8xf32>
    %110 = vector.extract_strided_slice %2 {offsets = [8, 72], sizes = [8, 8], strides = [1, 1]} : vector<16x96xf32> to vector<8x8xf32>
    %111 = tpu.transpose %109, [1, 0] : vector<8x8xf32> -> vector<8x8xf32>
    %cst_34 = arith.constant dense<0.000000e+00> : vector<8x8xf32>
    %112 = tpu.matmul %108, %111, %cst_34 {dimension_numbers = #tpu.dot_dimension_numbers<[1], [0], [0], [1], [0, 0, 1, 1], [], []>} : vector<8x8xf32>, vector<8x8xf32>, vector<8x8xf32> -> vector<8x8xf32>
    %cst_35 = arith.constant dense<0xFF800000> : vector<8xf32>
    %113 = vector.multi_reduction <maximumf>, %112, %cst_35 [1] : vector<8x8xf32> to vector<8xf32>
    %114 = vector.shape_cast %113 : vector<8xf32> to vector<8x1xf32>
    %115 = vector.broadcast %114 : vector<8x1xf32> to vector<8x8xf32>
    %116 = arith.subf %112, %115 : vector<8x8xf32>
    %117 = math.exp %116 : vector<8x8xf32>
    %cst_36 = arith.constant dense<0.000000e+00> : vector<8xf32>
    %118 = vector.multi_reduction <add>, %117, %cst_36 [1] : vector<8x8xf32> to vector<8xf32>
    %119 = vector.shape_cast %118 : vector<8xf32> to vector<8x1xf32>
    %120 = tpu.reciprocal %119 {approx = true} : vector<8x1xf32> -> vector<8x1xf32>
    %121 = vector.broadcast %120 : vector<8x1xf32> to vector<8x8xf32>
    %122 = arith.mulf %117, %121 : vector<8x8xf32>
    %cst_37 = arith.constant dense<0.000000e+00> : vector<8x8xf32>
    %123 = tpu.matmul %122, %110, %cst_37 {dimension_numbers = #tpu.dot_dimension_numbers<[1], [0], [0], [1], [0, 0, 1, 1], [], []>} : vector<8x8xf32>, vector<8x8xf32>, vector<8x8xf32> -> vector<8x8xf32>
    %124 = vector.extract_strided_slice %11 {offsets = [8, 0], sizes = [8, 32], strides = [1, 1]} : vector<32x32xf32> to vector<8x32xf32>
    %cst_38 = arith.constant dense<0.000000e+00> : vector<8x32xf32>
    %125 = tpu.matmul %123, %124, %cst_38 {dimension_numbers = #tpu.dot_dimension_numbers<[1], [0], [0], [1], [0, 0, 1, 1], [], []>} : vector<8x8xf32>, vector<8x32xf32>, vector<8x32xf32> -> vector<8x32xf32>
    %126 = arith.addf %107, %125 : vector<8x32xf32>
    %127 = vector.extract_strided_slice %10 {offsets = [8, 16], sizes = [8, 8], strides = [1, 1]} : vector<16x64xf32> to vector<8x8xf32>
    %128 = vector.extract_strided_slice %10 {offsets = [8, 48], sizes = [8, 8], strides = [1, 1]} : vector<16x64xf32> to vector<8x8xf32>
    %129 = vector.extract_strided_slice %2 {offsets = [8, 80], sizes = [8, 8], strides = [1, 1]} : vector<16x96xf32> to vector<8x8xf32>
    %130 = tpu.transpose %128, [1, 0] : vector<8x8xf32> -> vector<8x8xf32>
    %cst_39 = arith.constant dense<0.000000e+00> : vector<8x8xf32>
    %131 = tpu.matmul %127, %130, %cst_39 {dimension_numbers = #tpu.dot_dimension_numbers<[1], [0], [0], [1], [0, 0, 1, 1], [], []>} : vector<8x8xf32>, vector<8x8xf32>, vector<8x8xf32> -> vector<8x8xf32>
    %cst_40 = arith.constant dense<0xFF800000> : vector<8xf32>
    %132 = vector.multi_reduction <maximumf>, %131, %cst_40 [1] : vector<8x8xf32> to vector<8xf32>
    %133 = vector.shape_cast %132 : vector<8xf32> to vector<8x1xf32>
    %134 = vector.broadcast %133 : vector<8x1xf32> to vector<8x8xf32>
    %135 = arith.subf %131, %134 : vector<8x8xf32>
    %136 = math.exp %135 : vector<8x8xf32>
    %cst_41 = arith.constant dense<0.000000e+00> : vector<8xf32>
    %137 = vector.multi_reduction <add>, %136, %cst_41 [1] : vector<8x8xf32> to vector<8xf32>
    %138 = vector.shape_cast %137 : vector<8xf32> to vector<8x1xf32>
    %139 = tpu.reciprocal %138 {approx = true} : vector<8x1xf32> -> vector<8x1xf32>
    %140 = vector.broadcast %139 : vector<8x1xf32> to vector<8x8xf32>
    %141 = arith.mulf %136, %140 : vector<8x8xf32>
    %cst_42 = arith.constant dense<0.000000e+00> : vector<8x8xf32>
    %142 = tpu.matmul %141, %129, %cst_42 {dimension_numbers = #tpu.dot_dimension_numbers<[1], [0], [0], [1], [0, 0, 1, 1], [], []>} : vector<8x8xf32>, vector<8x8xf32>, vector<8x8xf32> -> vector<8x8xf32>
    %143 = vector.extract_strided_slice %11 {offsets = [16, 0], sizes = [8, 32], strides = [1, 1]} : vector<32x32xf32> to vector<8x32xf32>
    %cst_43 = arith.constant dense<0.000000e+00> : vector<8x32xf32>
    %144 = tpu.matmul %142, %143, %cst_43 {dimension_numbers = #tpu.dot_dimension_numbers<[1], [0], [0], [1], [0, 0, 1, 1], [], []>} : vector<8x8xf32>, vector<8x32xf32>, vector<8x32xf32> -> vector<8x32xf32>
    %145 = arith.addf %126, %144 : vector<8x32xf32>
    %146 = vector.extract_strided_slice %10 {offsets = [8, 24], sizes = [8, 8], strides = [1, 1]} : vector<16x64xf32> to vector<8x8xf32>
    %147 = vector.extract_strided_slice %10 {offsets = [8, 56], sizes = [8, 8], strides = [1, 1]} : vector<16x64xf32> to vector<8x8xf32>
    %148 = vector.extract_strided_slice %2 {offsets = [8, 88], sizes = [8, 8], strides = [1, 1]} : vector<16x96xf32> to vector<8x8xf32>
    %149 = tpu.transpose %147, [1, 0] : vector<8x8xf32> -> vector<8x8xf32>
    %cst_44 = arith.constant dense<0.000000e+00> : vector<8x8xf32>
    %150 = tpu.matmul %146, %149, %cst_44 {dimension_numbers = #tpu.dot_dimension_numbers<[1], [0], [0], [1], [0, 0, 1, 1], [], []>} : vector<8x8xf32>, vector<8x8xf32>, vector<8x8xf32> -> vector<8x8xf32>
    %cst_45 = arith.constant dense<0xFF800000> : vector<8xf32>
    %151 = vector.multi_reduction <maximumf>, %150, %cst_45 [1] : vector<8x8xf32> to vector<8xf32>
    %152 = vector.shape_cast %151 : vector<8xf32> to vector<8x1xf32>
    %153 = vector.broadcast %152 : vector<8x1xf32> to vector<8x8xf32>
    %154 = arith.subf %150, %153 : vector<8x8xf32>
    %155 = math.exp %154 : vector<8x8xf32>
    %cst_46 = arith.constant dense<0.000000e+00> : vector<8xf32>
    %156 = vector.multi_reduction <add>, %155, %cst_46 [1] : vector<8x8xf32> to vector<8xf32>
    %157 = vector.shape_cast %156 : vector<8xf32> to vector<8x1xf32>
    %158 = tpu.reciprocal %157 {approx = true} : vector<8x1xf32> -> vector<8x1xf32>
    %159 = vector.broadcast %158 : vector<8x1xf32> to vector<8x8xf32>
    %160 = arith.mulf %155, %159 : vector<8x8xf32>
    %cst_47 = arith.constant dense<0.000000e+00> : vector<8x8xf32>
    %161 = tpu.matmul %160, %148, %cst_47 {dimension_numbers = #tpu.dot_dimension_numbers<[1], [0], [0], [1], [0, 0, 1, 1], [], []>} : vector<8x8xf32>, vector<8x8xf32>, vector<8x8xf32> -> vector<8x8xf32>
    %162 = vector.extract_strided_slice %11 {offsets = [24, 0], sizes = [8, 32], strides = [1, 1]} : vector<32x32xf32> to vector<8x32xf32>
    %cst_48 = arith.constant dense<0.000000e+00> : vector<8x32xf32>
    %163 = tpu.matmul %161, %162, %cst_48 {dimension_numbers = #tpu.dot_dimension_numbers<[1], [0], [0], [1], [0, 0, 1, 1], [], []>} : vector<8x8xf32>, vector<8x32xf32>, vector<8x32xf32> -> vector<8x32xf32>
    %164 = arith.addf %145, %163 : vector<8x32xf32>
    %165 = vector.broadcast %12 : vector<1x32xf32> to vector<8x32xf32>
    %166 = arith.addf %164, %165 : vector<8x32xf32>
    %167 = tpu.concatenate %89, %166 in 0 : vector<8x32xf32>, vector<8x32xf32> -> vector<16x32xf32>
    %c0_49 = arith.constant 0 : index
    %c0_50 = arith.constant 0 : index
    %168 = vector.load %arg2[%c0_49, %c0_50] : memref<16x32xf32, #tpu.memory_space<vmem>>, vector<16x32xf32>
    tpu.vector_store %arg2[%c0_49, %c0_50], %167 {strides = array<i32>} : memref<16x32xf32, #tpu.memory_space<vmem>>, vector<16x32xf32>,
    return
  }
}

</mosaic_0001>

<llo_original>
// kernel: tpu_custom_call.1
$region0: #{tpu_custom_call.1}
  #allocation0 [shape = 'u32[]', space=smem, size = 0x4, offset = 0x4, fixed_abs, tag = 'smem constant byte address 0x4 - core index']
  #allocation1 [shape = 'u32[72,128]{1,0:T(1,128)}', space=vmem, size = 0x9000, scoped, tag = 'internal scratch']
  %s0 = inlined_call_operand.hbm [shape: f32[16,40], index: 0, kind: input, shape index: {}]
  %s1 = inlined_call_operand.hbm [shape: f32[176,96], index: 1, kind: input, shape index: {}]
  %s2 = inlined_call_operand.hbm [shape: f32[16,32], index: 2, kind: output, shape index: {}]
  %s3 = sld [smem:[#allocation0]]
  $region26: #{tpu_custom_call.1} parent=0
    _
  %s5 = ssub.s32 1, %s3
  %s6 = scalar_select 0, %s5, %s3
  $region1: #{tpu_custom_call.1} parent=0
    #allocation2 [shape = 'u8[8192]{0}', space=vmem, size = 0x2000, scoped, tag = 'input window, operand 0, single buffered']
    #allocation3 [shape = 's32[1]{0}', space=sflag, size = 0x4, scoped, tag = 'scoped memory for tpu_custom_call.1']
    #allocation4 [shape = 's32[1]{0}', space=sflag, size = 0x4, scoped, tag = 'scoped memory for tpu_custom_call.1']
    #allocation5 [shape = 'u8[90112]{0}', space=vmem, size = 0x16000, scoped, tag = 'input window, operand 1, single buffered']
    #allocation6 [shape = 's32[1]{0}', space=sflag, size = 0x4, scoped, tag = 'scoped memory for tpu_custom_call.1']
    #allocation7 [shape = 'u8[8192]{0}', space=vmem, size = 0x2000, scoped, tag = 'output window, operand 0, single buffered']
    %7 = vsyncpa [#allocation3], 0
    %8 = vsyncpa [#allocation6], 0
    %9 = vsyncpa [#allocation4], 0
    // Predicated region
    $region2: #{tpu_custom_call.1} parent=1 // pred_check
      _
    $region3: #{tpu_custom_call.1} parent=1 // pred_check_branch
      %11 = sbr.rel (0) target = $region5
    $region4: #{tpu_custom_call.1} parent=1 // pred_region
      %13 = vsyncadd [#allocation3], 0
      %s14 = sshll.u32 %s0, 4
      %s15 = int_to_ptr.hbm [resolvable:$true] %s14
      %s16 = sshll.u32 [#allocation2], 4
      %s17 = int_to_ptr.vmem [resolvable:$true] %s16
      %22 = dma.hbm_to_vmem [thread:$0]  %s15, 256, %s17, [#allocation3], 128, 128, 8
    $region5: #{tpu_custom_call.1} parent=1 // pred_fallthru
      _
    // Predicated region
    $region6: #{tpu_custom_call.1} parent=1 // pred_check
      _
    $region7: #{tpu_custom_call.1} parent=1 // pred_check_branch
      %24 = sbr.rel (0) target = $region9
    $region8: #{tpu_custom_call.1} parent=1 // pred_region
      %26 = vsyncadd [#allocation6], 0
      %s27 = sshll.u32 %s1, 4
      %s28 = int_to_ptr.hbm [resolvable:$true] %s27
      %s29 = sshll.u32 [#allocation5], 4
      %s30 = int_to_ptr.vmem [resolvable:$true] %s29
      %35 = dma.hbm_to_vmem [thread:$0]  %s28, 2816, %s30, [#allocation6], 128, 128, 8
    $region9: #{tpu_custom_call.1} parent=1 // pred_fallthru
      _
    // Predicated region
    $region10: #{tpu_custom_call.1} parent=1 // pred_check
      _
    $region11: #{tpu_custom_call.1} parent=1 // pred_check_branch
      %37 = sbr.rel (0) target = $region13
    $region12: #{tpu_custom_call.1} parent=1 // pred_region
      %39 = dma.done [#allocation3], 256
    $region13: #{tpu_custom_call.1} parent=1 // pred_fallthru
      _
    // Predicated region
    $region14: #{tpu_custom_call.1} parent=1 // pred_check
      _
    $region15: #{tpu_custom_call.1} parent=1 // pred_check_branch
      %41 = sbr.rel (0) target = $region17
    $region16: #{tpu_custom_call.1} parent=1 // pred_region
      %43 = dma.done [#allocation6], 2816
    $region17: #{tpu_custom_call.1} parent=1 // pred_fallthru
      _
    %v44 = vld [vmem:[#allocation2] sm:$0xff]
    %v45 = vld [vmem:[#allocation2 + $0x8] sm:$0xff]
    %v46 = vld [vmem:[#allocation5] sm:$0xff]
    %v47 = vld [vmem:[#allocation5 + $0x8] sm:$0xff]
    %v48 = vld [vmem:[#allocation5 + $0x10] sm:$0xff]
    %v49 = vld [vmem:[#allocation5 + $0x18] sm:$0xff]
    %v50 = vld [vmem:[#allocation5 + $0x20] sm:$0xff]
    %vm51 = vcmask 326656
    %v53 = vsel %vm51, %v44, 0
    %v56 = vsel %vm51, %v45, 0
    %58 = vmatpush.msra.mxu0 0.0
    %59 = vmatpush.msra.mxu0 0.0
    %60 = vmatpush.msra.mxu0 0.0
    %61 = vmatpush.msra.mxu0 0.0
    %62 = vmatpush.msra.mxu0 0.0
    %63 = vmatpush.msra.mxu0 0.0
    %64 = vmatpush.msra.mxu0 0.0
    %65 = vmatpush.msra.mxu0 0.0
    %66 = vmatpush.msra.mxu0 0.0
    %67 = vmatpush.msra.mxu0 0.0
    %68 = vmatpush.msra.mxu0 0.0
    %69 = vmatpush.msra.mxu0 %v50
    %70 = vmatpush.msra.mxu0 %v49
    %71 = vmatpush.msra.mxu0 %v48
    %72 = vmatpush.msra.mxu0 %v47
    %73 = vmatpush.msra.mxu0 %v46
    %74 = vmatmul.f32.gmra.mxu0 %v53
    %v75 = vpop.f32.mrf.mxu0
    %v76 = vadd.f32 0.0, %v75
    %77 = vmatmul.f32.gmra.mxu0 %v56
    %v78 = vpop.f32.mrf.mxu0
    %v79 = vadd.f32 0.0, %v78
    %80 = vdwg.mxu0
    %v81 = vld [vmem:[#allocation5 + $0x28] sm:$0xff]
    %v82 = vld [vmem:[#allocation5 + $0x30] sm:$0xff]
    %v83 = vld [vmem:[#allocation5 + $0x38] sm:$0xff]
    %v84 = vld [vmem:[#allocation5 + $0x40] sm:$0xff]
    %v85 = vld [vmem:[#allocation5 + $0x48] sm:$0xff]
    %v86 = vld [vmem:[#allocation5 + $0x50] sm:$0xff]
    %v87 = vld [vmem:[#allocation5 + $0x58] sm:$0xff]
    %v88 = vld [vmem:[#allocation5 + $0x60] sm:$0xff]
    %vm89 = vcmask 523264
    %v91 = vsel %vm89, %v76, 0
    %v94 = vsel %vm89, %v79, 0
    %96 = vmatpush.msra.mxu0 0.0
    %97 = vmatpush.msra.mxu0 0.0
    %98 = vmatpush.msra.mxu0 0.0
    %99 = vmatpush.msra.mxu0 0.0
    %100 = vmatpush.msra.mxu0 0.0
    %101 = vmatpush.msra.mxu0 0.0
    %102 = vmatpush.msra.mxu0 0.0
    %103 = vmatpush.msra.mxu0 0.0
    %104 = vmatpush.msra.mxu0 %v88
    %105 = vmatpush.msra.mxu0 %v87
    %106 = vmatpush.msra.mxu0 %v86
    %107 = vmatpush.msra.mxu0 %v85
    %108 = vmatpush.msra.mxu0 %v84
    %109 = vmatpush.msra.mxu0 %v83
    %110 = vmatpush.msra.mxu0 %v82
    %111 = vmatpush.msra.mxu0 %v81
    %112 = vmatmul.f32.gmra.mxu0 %v91
    %v113 = vpop.f32.mrf.mxu0
    %v114 = vadd.f32 0.0, %v113
    %115 = vmatmul.f32.gmra.mxu0 %v94
    %v116 = vpop.f32.mrf.mxu0
    %v117 = vadd.f32 0.0, %v116
    %118 = vdwg.mxu0
    %v119 = vld [vmem:[#allocation5 + $0x90] sm:$0xff]
    %v120 = vld [vmem:[#allocation5 + $0x98] sm:$0xff]
    %v121 = vld [vmem:[#allocation5 + $0xa0] sm:$0xff]
    %v122 = vld [vmem:[#allocation5 + $0xa8] sm:$0xff]
    %v123 = vmul.f32 %v76, %v119
    %v124 = vmul.f32 %v79, %v120
    %v125 = vmul.f32 %v114, %v121
    %v126 = vmul.f32 %v117, %v122
    %v127 = vadd.f32 %v123, %v125
    %v128 = vadd.f32 %v124, %v126
    %v129 = vld [vmem:[#allocation5 + $0x68] sm:$0xff]
    %v130 = vld [vmem:[#allocation5 + $0x70] sm:$0xff]
    %v131 = vld [vmem:[#allocation5 + $0x78] sm:$0xff]
    %v132 = vld [vmem:[#allocation5 + $0x80] sm:$0xff]
    %v133 = vld [vmem:[#allocation5 + $0x88] sm:$0x1]
    %135 = vrot.lane.b32.xlu0 %v127, 96
    %v136 = vpop.permute.xlu0 %135
    %vm137 = vcmask 64512
    %v138 = vsel %vm137, %v127, 0
    %v140 = vsel %vm137, %v136, 0
    %142 = vmatpush.xpose.msra.mxu0 0.0
    %143 = vmatpush.xpose.msra.mxu0 0.0
    %144 = vmatpush.xpose.msra.mxu0 0.0
    %145 = vmatpush.xpose.msra.mxu0 0.0
    %146 = vmatpush.xpose.msra.mxu0 0.0
    %147 = vmatpush.xpose.msra.mxu0 0.0
    %148 = vmatpush.xpose.msra.mxu0 0.0
    %149 = vmatpush.xpose.msra.mxu0 0.0
    %150 = vmatpush.xpose.msra.mxu0 0.0
    %151 = vmatpush.xpose.msra.mxu0 0.0
    %152 = vmatpush.xpose.msra.mxu0 0.0
    %153 = vmatpush.xpose.msra.mxu0 0.0
    %154 = vmatpush.xpose.msra.mxu0 0.0
    %155 = vmatpush.xpose.msra.mxu0 0.0
    %156 = vmatpush.xpose.msra.mxu0 0.0
    %157 = vmatpush.xpose.msra.mxu0 %v140
    %158 = vmatmul.f32.gmra.mxu0 %v138
    %v159 = vpop.f32.mrf.mxu0
    %v160 = vadd.f32 0.0, %v159
    %161 = vdwg.mxu0
    %v162 = vsel %vm137, %v160, -inf
    %163 = vmax.xlane.f32.xlu0 %v162
    %v164 = vpop.xlane.xlu0 %163
    %v165 = vsub.f32 %v160, %v164
    %v166 = vmul.f32 %v165, 1.442695
    %v167 = vpow.pop %v166
    %v168 = vsel %vm137, %v167, 0.0
    %169 = vadd.xlane.f32.xlu0 %v168
    %v170 = vpop.xlane.xlu0 %169
    %v171 = vrcp.pop %v170
    %v172 = vmul.f32 %v167, %v171
    %173 = vrot.lane.b32.xlu0 %v76, 64
    %v174 = vpop.permute.xlu0 %173
    %v177 = vsel %vm137, %v172, 0
    %179 = vmatpush.msra.mxu0 0.0
    %180 = vmatpush.msra.mxu0 0.0
    %181 = vmatpush.msra.mxu0 0.0
    %182 = vmatpush.msra.mxu0 0.0
    %183 = vmatpush.msra.mxu0 0.0
    %184 = vmatpush.msra.mxu0 0.0
    %185 = vmatpush.msra.mxu0 0.0
    %186 = vmatpush.msra.mxu0 0.0
    %187 = vmatpush.msra.mxu0 0.0
    %188 = vmatpush.msra.mxu0 0.0
    %189 = vmatpush.msra.mxu0 0.0
    %190 = vmatpush.msra.mxu0 0.0
    %191 = vmatpush.msra.mxu0 0.0
    %192 = vmatpush.msra.mxu0 0.0
    %193 = vmatpush.msra.mxu0 0.0
    %194 = vmatpush.msra.mxu0 %v174
    %195 = vmatmul.f32.gmra.mxu0 %v177
    %v196 = vpop.f32.mrf.mxu0
    %v197 = vadd.f32 0.0, %v196
    %198 = vdwg.mxu0
    %199 = vrot.lane.b32.xlu0 %v127, 120
    %v200 = vpop.permute.xlu0 %199
    %201 = vrot.lane.b32.xlu0 %v127, 88
    %v202 = vpop.permute.xlu0 %201
    %v203 = vsel %vm137, %v200, 0
    %v205 = vsel %vm137, %v202, 0
    %207 = vmatpush.xpose.msra.mxu0 0.0
    %208 = vmatpush.xpose.msra.mxu0 0.0
    %209 = vmatpush.xpose.msra.mxu0 0.0
    %210 = vmatpush.xpose.msra.mxu0 0.0
    %211 = vmatpush.xpose.msra.mxu0 0.0
    %212 = vmatpush.xpose.msra.mxu0 0.0
    %213 = vmatpush.xpose.msra.mxu0 0.0
    %214 = vmatpush.xpose.msra.mxu0 0.0
    %215 = vmatpush.xpose.msra.mxu0 0.0
    %216 = vmatpush.xpose.msra.mxu0 0.0
    %217 = vmatpush.xpose.msra.mxu0 0.0
    %218 = vmatpush.xpose.msra.mxu0 0.0
    %219 = vmatpush.xpose.msra.mxu0 0.0
    %220 = vmatpush.xpose.msra.mxu0 0.0
    %221 = vmatpush.xpose.msra.mxu0 0.0
    %222 = vmatpush.xpose.msra.mxu0 %v205
    %223 = vmatmul.f32.gmra.mxu0 %v203
    %v224 = vpop.f32.mrf.mxu0
    %v225 = vadd.f32 0.0, %v224
    %226 = vdwg.mxu0
    %v227 = vsel %vm137, %v225, -inf
    %228 = vmax.xlane.f32.xlu0 %v227
    %v229 = vpop.xlane.xlu0 %228
    %v230 = vsub.f32 %v225, %v229
    %v231 = vmul.f32 %v230, 1.442695
    %v232 = vpow.pop %v231
    %v233 = vsel %vm137, %v232, 0.0
    %234 = vadd.xlane.f32.xlu0 %v233
    %v235 = vpop.xlane.xlu0 %234
    %v236 = vrcp.pop %v235
    %v237 = vmul.f32 %v232, %v236
    %238 = vrot.lane.b32.xlu0 %v76, 56
    %v239 = vpop.permute.xlu0 %238
    %v242 = vsel %vm137, %v237, 0
    %244 = vmatpush.msra.mxu0 0.0
    %245 = vmatpush.msra.mxu0 0.0
    %246 = vmatpush.msra.mxu0 0.0
    %247 = vmatpush.msra.mxu0 0.0
    %248 = vmatpush.msra.mxu0 0.0
    %249 = vmatpush.msra.mxu0 0.0
    %250 = vmatpush.msra.mxu0 0.0
    %251 = vmatpush.msra.mxu0 0.0
    %252 = vmatpush.msra.mxu0 0.0
    %253 = vmatpush.msra.mxu0 0.0
    %254 = vmatpush.msra.mxu0 0.0
    %255 = vmatpush.msra.mxu0 0.0
    %256 = vmatpush.msra.mxu0 0.0
    %257 = vmatpush.msra.mxu0 0.0
    %258 = vmatpush.msra.mxu0 0.0
    %259 = vmatpush.msra.mxu0 %v239
    %260 = vmatmul.f32.gmra.mxu0 %v242
    %v261 = vpop.f32.mrf.mxu0
    %v262 = vadd.f32 0.0, %v261
    %263 = vdwg.mxu0
    %v265 = vsel %vm137, %v262, 0
    %267 = vmatpush.msra.mxu0 0.0
    %268 = vmatpush.msra.mxu0 0.0
    %269 = vmatpush.msra.mxu0 0.0
    %270 = vmatpush.msra.mxu0 0.0
    %271 = vmatpush.msra.mxu0 0.0
    %272 = vmatpush.msra.mxu0 0.0
    %273 = vmatpush.msra.mxu0 0.0
    %274 = vmatpush.msra.mxu0 0.0
    %275 = vmatpush.msra.mxu0 0.0
    %276 = vmatpush.msra.mxu0 0.0
    %277 = vmatpush.msra.mxu0 0.0
    %278 = vmatpush.msra.mxu0 0.0
    %279 = vmatpush.msra.mxu0 0.0
    %280 = vmatpush.msra.mxu0 0.0
    %281 = vmatpush.msra.mxu0 0.0
    %282 = vmatpush.msra.mxu0 %v130
    %283 = vmatmul.f32.gmra.mxu0 %v265
    %v284 = vpop.f32.mrf.mxu0
    %v285 = vadd.f32 0.0, %v284
    %286 = vdwg.mxu0
    %v288 = vsel %vm137, %v197, 0
    %290 = vmatpush.msra.mxu0 0.0
    %291 = vmatpush.msra.mxu0 0.0
    %292 = vmatpush.msra.mxu0 0.0
    %293 = vmatpush.msra.mxu0 0.0
    %294 = vmatpush.msra.mxu0 0.0
    %295 = vmatpush.msra.mxu0 0.0
    %296 = vmatpush.msra.mxu0 0.0
    %297 = vmatpush.msra.mxu0 0.0
    %298 = vmatpush.msra.mxu0 0.0
    %299 = vmatpush.msra.mxu0 0.0
    %300 = vmatpush.msra.mxu0 0.0
    %301 = vmatpush.msra.mxu0 0.0
    %302 = vmatpush.msra.mxu0 0.0
    %303 = vmatpush.msra.mxu0 0.0
    %304 = vmatpush.msra.mxu0 0.0
    %305 = vmatpush.msra.mxu0 %v129
    %306 = vmatmul.f32.gmra.mxu0 %v288
    %v307 = vpop.f32.mrf.mxu0
    %v308 = vadd.f32 %v285, %v307
    %309 = vdwg.mxu0
    %310 = vrot.lane.b32.xlu0 %v127, 112
    %v311 = vpop.permute.xlu0 %310
    %312 = vrot.lane.b32.xlu0 %v127, 80
    %v313 = vpop.permute.xlu0 %312
    %v314 = vsel %vm137, %v311, 0
    %v316 = vsel %vm137, %v313, 0
    %318 = vmatpush.xpose.msra.mxu0 0.0
    %319 = vmatpush.xpose.msra.mxu0 0.0
    %320 = vmatpush.xpose.msra.mxu0 0.0
    %321 = vmatpush.xpose.msra.mxu0 0.0
    %322 = vmatpush.xpose.msra.mxu0 0.0
    %323 = vmatpush.xpose.msra.mxu0 0.0
    %324 = vmatpush.xpose.msra.mxu0 0.0
    %325 = vmatpush.xpose.msra.mxu0 0.0
    %326 = vmatpush.xpose.msra.mxu0 0.0
    %327 = vmatpush.xpose.msra.mxu0 0.0
    %328 = vmatpush.xpose.msra.mxu0 0.0
    %329 = vmatpush.xpose.msra.mxu0 0.0
    %330 = vmatpush.xpose.msra.mxu0 0.0
    %331 = vmatpush.xpose.msra.mxu0 0.0
    %332 = vmatpush.xpose.msra.mxu0 0.0
    %333 = vmatpush.xpose.msra.mxu0 %v316
    %334 = vmatmul.f32.gmra.mxu0 %v314
    %v335 = vpop.f32.mrf.mxu0
    %v336 = vadd.f32 0.0, %v335
    %337 = vdwg.mxu0
    %v338 = vsel %vm137, %v336, -inf
    %339 = vmax.xlane.f32.xlu0 %v338
    %v340 = vpop.xlane.xlu0 %339
    %v341 = vsub.f32 %v336, %v340
    %v342 = vmul.f32 %v341, 1.442695
    %v343 = vpow.pop %v342
    %v344 = vsel %vm137, %v343, 0.0
    %345 = vadd.xlane.f32.xlu0 %v344
    %v346 = vpop.xlane.xlu0 %345
    %v347 = vrcp.pop %v346
    %v348 = vmul.f32 %v343, %v347
    %349 = vrot.lane.b32.xlu0 %v76, 48
    %v350 = vpop.permute.xlu0 %349
    %v353 = vsel %vm137, %v348, 0
    %355 = vmatpush.msra.mxu0 0.0
    %356 = vmatpush.msra.mxu0 0.0
    %357 = vmatpush.msra.mxu0 0.0
    %358 = vmatpush.msra.mxu0 0.0
    %359 = vmatpush.msra.mxu0 0.0
    %360 = vmatpush.msra.mxu0 0.0
    %361 = vmatpush.msra.mxu0 0.0
    %362 = vmatpush.msra.mxu0 0.0
    %363 = vmatpush.msra.mxu0 0.0
    %364 = vmatpush.msra.mxu0 0.0
    %365 = vmatpush.msra.mxu0 0.0
    %366 = vmatpush.msra.mxu0 0.0
    %367 = vmatpush.msra.mxu0 0.0
    %368 = vmatpush.msra.mxu0 0.0
    %369 = vmatpush.msra.mxu0 0.0
    %370 = vmatpush.msra.mxu0 %v350
    %371 = vmatmul.f32.gmra.mxu0 %v353
    %v372 = vpop.f32.mrf.mxu0
    %v373 = vadd.f32 0.0, %v372
    %374 = vdwg.mxu0
    %v376 = vsel %vm137, %v373, 0
    %378 = vmatpush.msra.mxu0 0.0
    %379 = vmatpush.msra.mxu0 0.0
    %380 = vmatpush.msra.mxu0 0.0
    %381 = vmatpush.msra.mxu0 0.0
    %382 = vmatpush.msra.mxu0 0.0
    %383 = vmatpush.msra.mxu0 0.0
    %384 = vmatpush.msra.mxu0 0.0
    %385 = vmatpush.msra.mxu0 0.0
    %386 = vmatpush.msra.mxu0 0.0
    %387 = vmatpush.msra.mxu0 0.0
    %388 = vmatpush.msra.mxu0 0.0
    %389 = vmatpush.msra.mxu0 0.0
    %390 = vmatpush.msra.mxu0 0.0
    %391 = vmatpush.msra.mxu0 0.0
    %392 = vmatpush.msra.mxu0 0.0
    %393 = vmatpush.msra.mxu0 %v131
    %394 = vmatmul.f32.gmra.mxu0 %v376
    %v395 = vpop.f32.mrf.mxu0
    %v396 = vadd.f32 0.0, %v395
    %397 = vdwg.mxu0
    %v398 = vadd.f32 %v308, %v396
    %399 = vrot.lane.b32.xlu0 %v127, 104
    %v400 = vpop.permute.xlu0 %399
    %401 = vrot.lane.b32.xlu0 %v127, 72
    %v402 = vpop.permute.xlu0 %401
    %v403 = vsel %vm137, %v400, 0
    %v405 = vsel %vm137, %v402, 0
    %407 = vmatpush.xpose.msra.mxu0 0.0
    %408 = vmatpush.xpose.msra.mxu0 0.0
    %409 = vmatpush.xpose.msra.mxu0 0.0
    %410 = vmatpush.xpose.msra.mxu0 0.0
    %411 = vmatpush.xpose.msra.mxu0 0.0
    %412 = vmatpush.xpose.msra.mxu0 0.0
    %413 = vmatpush.xpose.msra.mxu0 0.0
    %414 = vmatpush.xpose.msra.mxu0 0.0
    %415 = vmatpush.xpose.msra.mxu0 0.0
    %416 = vmatpush.xpose.msra.mxu0 0.0
    %417 = vmatpush.xpose.msra.mxu0 0.0
    %418 = vmatpush.xpose.msra.mxu0 0.0
    %419 = vmatpush.xpose.msra.mxu0 0.0
    %420 = vmatpush.xpose.msra.mxu0 0.0
    %421 = vmatpush.xpose.msra.mxu0 0.0
    %422 = vmatpush.xpose.msra.mxu0 %v405
    %423 = vmatmul.f32.gmra.mxu0 %v403
    %v424 = vpop.f32.mrf.mxu0
    %v425 = vadd.f32 0.0, %v424
    %426 = vdwg.mxu0
    %v427 = vsel %vm137, %v425, -inf
    %428 = vmax.xlane.f32.xlu0 %v427
    %v429 = vpop.xlane.xlu0 %428
    %v430 = vsub.f32 %v425, %v429
    %v431 = vmul.f32 %v430, 1.442695
    %v432 = vpow.pop %v431
    %v433 = vsel %vm137, %v432, 0.0
    %434 = vadd.xlane.f32.xlu0 %v433
    %v435 = vpop.xlane.xlu0 %434
    %v436 = vrcp.pop %v435
    %v437 = vmul.f32 %v432, %v436
    %438 = vrot.lane.b32.xlu0 %v76, 40
    %v439 = vpop.permute.xlu0 %438
    %v442 = vsel %vm137, %v437, 0
    %444 = vmatpush.msra.mxu0 0.0
    %445 = vmatpush.msra.mxu0 0.0
    %446 = vmatpush.msra.mxu0 0.0
    %447 = vmatpush.msra.mxu0 0.0
    %448 = vmatpush.msra.mxu0 0.0
    %449 = vmatpush.msra.mxu0 0.0
    %450 = vmatpush.msra.mxu0 0.0
    %451 = vmatpush.msra.mxu0 0.0
    %452 = vmatpush.msra.mxu0 0.0
    %453 = vmatpush.msra.mxu0 0.0
    %454 = vmatpush.msra.mxu0 0.0
    %455 = vmatpush.msra.mxu0 0.0
    %456 = vmatpush.msra.mxu0 0.0
    %457 = vmatpush.msra.mxu0 0.0
    %458 = vmatpush.msra.mxu0 0.0
    %459 = vmatpush.msra.mxu0 %v439
    %460 = vmatmul.f32.gmra.mxu0 %v442
    %v461 = vpop.f32.mrf.mxu0
    %v462 = vadd.f32 0.0, %v461
    %463 = vdwg.mxu0
    %v465 = vsel %vm137, %v462, 0
    %467 = vmatpush.msra.mxu0 0.0
    %468 = vmatpush.msra.mxu0 0.0
    %469 = vmatpush.msra.mxu0 0.0
    %470 = vmatpush.msra.mxu0 0.0
    %471 = vmatpush.msra.mxu0 0.0
    %472 = vmatpush.msra.mxu0 0.0
    %473 = vmatpush.msra.mxu0 0.0
    %474 = vmatpush.msra.mxu0 0.0
    %475 = vmatpush.msra.mxu0 0.0
    %476 = vmatpush.msra.mxu0 0.0
    %477 = vmatpush.msra.mxu0 0.0
    %478 = vmatpush.msra.mxu0 0.0
    %479 = vmatpush.msra.mxu0 0.0
    %480 = vmatpush.msra.mxu0 0.0
    %481 = vmatpush.msra.mxu0 0.0
    %482 = vmatpush.msra.mxu0 %v132
    %483 = vmatmul.f32.gmra.mxu0 %v465
    %v484 = vpop.f32.mrf.mxu0
    %v485 = vadd.f32 0.0, %v484
    %486 = vdwg.mxu0
    %v487 = vadd.f32 %v398, %v485
    %v488 = vperm.slane %v133, 0
    %v489 = vadd.f32 %v487, %v488
    %491 = vrot.lane.b32.xlu0 %v128, 96
    %v492 = vpop.permute.xlu0 %491
    %v493 = vsel %vm137, %v128, 0
    %v495 = vsel %vm137, %v492, 0
    %497 = vmatpush.xpose.msra.mxu0 0.0
    %498 = vmatpush.xpose.msra.mxu0 0.0
    %499 = vmatpush.xpose.msra.mxu0 0.0
    %500 = vmatpush.xpose.msra.mxu0 0.0
    %501 = vmatpush.xpose.msra.mxu0 0.0
    %502 = vmatpush.xpose.msra.mxu0 0.0
    %503 = vmatpush.xpose.msra.mxu0 0.0
    %504 = vmatpush.xpose.msra.mxu0 0.0
    %505 = vmatpush.xpose.msra.mxu0 0.0
    %506 = vmatpush.xpose.msra.mxu0 0.0
    %507 = vmatpush.xpose.msra.mxu0 0.0
    %508 = vmatpush.xpose.msra.mxu0 0.0
    %509 = vmatpush.xpose.msra.mxu0 0.0
    %510 = vmatpush.xpose.msra.mxu0 0.0
    %511 = vmatpush.xpose.msra.mxu0 0.0
    %512 = vmatpush.xpose.msra.mxu0 %v495
    %513 = vmatmul.f32.gmra.mxu0 %v493
    %v514 = vpop.f32.mrf.mxu0
    %v515 = vadd.f32 0.0, %v514
    %516 = vdwg.mxu0
    %v517 = vsel %vm137, %v515, -inf
    %518 = vmax.xlane.f32.xlu0 %v517
    %v519 = vpop.xlane.xlu0 %518
    %v520 = vsub.f32 %v515, %v519
    %v521 = vmul.f32 %v520, 1.442695
    %v522 = vpow.pop %v521
    %v523 = vsel %vm137, %v522, 0.0
    %524 = vadd.xlane.f32.xlu0 %v523
    %v525 = vpop.xlane.xlu0 %524
    %v526 = vrcp.pop %v525
    %v527 = vmul.f32 %v522, %v526
    %528 = vrot.lane.b32.xlu0 %v79, 64
    %v529 = vpop.permute.xlu0 %528
    %v532 = vsel %vm137, %v527, 0
    %534 = vmatpush.msra.mxu0 0.0
    %535 = vmatpush.msra.mxu0 0.0
    %536 = vmatpush.msra.mxu0 0.0
    %537 = vmatpush.msra.mxu0 0.0
    %538 = vmatpush.msra.mxu0 0.0
    %539 = vmatpush.msra.mxu0 0.0
    %540 = vmatpush.msra.mxu0 0.0
    %541 = vmatpush.msra.mxu0 0.0
    %542 = vmatpush.msra.mxu0 0.0
    %543 = vmatpush.msra.mxu0 0.0
    %544 = vmatpush.msra.mxu0 0.0
    %545 = vmatpush.msra.mxu0 0.0
    %546 = vmatpush.msra.mxu0 0.0
    %547 = vmatpush.msra.mxu0 0.0
    %548 = vmatpush.msra.mxu0 0.0
    %549 = vmatpush.msra.mxu0 %v529
    %550 = vmatmul.f32.gmra.mxu0 %v532
    %v551 = vpop.f32.mrf.mxu0
    %v552 = vadd.f32 0.0, %v551
    %553 = vdwg.mxu0
    %554 = vrot.lane.b32.xlu0 %v128, 120
    %v555 = vpop.permute.xlu0 %554
    %556 = vrot.lane.b32.xlu0 %v128, 88
    %v557 = vpop.permute.xlu0 %556
    %v558 = vsel %vm137, %v555, 0
    %v560 = vsel %vm137, %v557, 0
    %562 = vmatpush.xpose.msra.mxu0 0.0
    %563 = vmatpush.xpose.msra.mxu0 0.0
    %564 = vmatpush.xpose.msra.mxu0 0.0
    %565 = vmatpush.xpose.msra.mxu0 0.0
    %566 = vmatpush.xpose.msra.mxu0 0.0
    %567 = vmatpush.xpose.msra.mxu0 0.0
    %568 = vmatpush.xpose.msra.mxu0 0.0
    %569 = vmatpush.xpose.msra.mxu0 0.0
    %570 = vmatpush.xpose.msra.mxu0 0.0
    %571 = vmatpush.xpose.msra.mxu0 0.0
    %572 = vmatpush.xpose.msra.mxu0 0.0
    %573 = vmatpush.xpose.msra.mxu0 0.0
    %574 = vmatpush.xpose.msra.mxu0 0.0
    %575 = vmatpush.xpose.msra.mxu0 0.0
    %576 = vmatpush.xpose.msra.mxu0 0.0
    %577 = vmatpush.xpose.msra.mxu0 %v560
    %578 = vmatmul.f32.gmra.mxu0 %v558
    %v579 = vpop.f32.mrf.mxu0
    %v580 = vadd.f32 0.0, %v579
    %581 = vdwg.mxu0
    %v582 = vsel %vm137, %v580, -inf
    %583 = vmax.xlane.f32.xlu0 %v582
    %v584 = vpop.xlane.xlu0 %583
    %v585 = vsub.f32 %v580, %v584
    %v586 = vmul.f32 %v585, 1.442695
    %v587 = vpow.pop %v586
    %v588 = vsel %vm137, %v587, 0.0
    %589 = vadd.xlane.f32.xlu0 %v588
    %v590 = vpop.xlane.xlu0 %589
    %v591 = vrcp.pop %v590
    %v592 = vmul.f32 %v587, %v591
    %593 = vrot.lane.b32.xlu0 %v79, 56
    %v594 = vpop.permute.xlu0 %593
    %v597 = vsel %vm137, %v592, 0
    %599 = vmatpush.msra.mxu0 0.0
    %600 = vmatpush.msra.mxu0 0.0
    %601 = vmatpush.msra.mxu0 0.0
    %602 = vmatpush.msra.mxu0 0.0
    %603 = vmatpush.msra.mxu0 0.0
    %604 = vmatpush.msra.mxu0 0.0
    %605 = vmatpush.msra.mxu0 0.0
    %606 = vmatpush.msra.mxu0 0.0
    %607 = vmatpush.msra.mxu0 0.0
    %608 = vmatpush.msra.mxu0 0.0
    %609 = vmatpush.msra.mxu0 0.0
    %610 = vmatpush.msra.mxu0 0.0
    %611 = vmatpush.msra.mxu0 0.0
    %612 = vmatpush.msra.mxu0 0.0
    %613 = vmatpush.msra.mxu0 0.0
    %614 = vmatpush.msra.mxu0 %v594
    %615 = vmatmul.f32.gmra.mxu0 %v597
    %v616 = vpop.f32.mrf.mxu0
    %v617 = vadd.f32 0.0, %v616
    %618 = vdwg.mxu0
    %v620 = vsel %vm137, %v617, 0
    %622 = vmatpush.msra.mxu0 0.0
    %623 = vmatpush.msra.mxu0 0.0
    %624 = vmatpush.msra.mxu0 0.0
    %625 = vmatpush.msra.mxu0 0.0
    %626 = vmatpush.msra.mxu0 0.0
    %627 = vmatpush.msra.mxu0 0.0
    %628 = vmatpush.msra.mxu0 0.0
    %629 = vmatpush.msra.mxu0 0.0
    %630 = vmatpush.msra.mxu0 0.0
    %631 = vmatpush.msra.mxu0 0.0
    %632 = vmatpush.msra.mxu0 0.0
    %633 = vmatpush.msra.mxu0 0.0
    %634 = vmatpush.msra.mxu0 0.0
    %635 = vmatpush.msra.mxu0 0.0
    %636 = vmatpush.msra.mxu0 0.0
    %637 = vmatpush.msra.mxu0 %v130
    %638 = vmatmul.f32.gmra.mxu0 %v620
    %v639 = vpop.f32.mrf.mxu0
    %v640 = vadd.f32 0.0, %v639
    %641 = vdwg.mxu0
    %v643 = vsel %vm137, %v552, 0
    %645 = vmatpush.msra.mxu0 0.0
    %646 = vmatpush.msra.mxu0 0.0
    %647 = vmatpush.msra.mxu0 0.0
    %648 = vmatpush.msra.mxu0 0.0
    %649 = vmatpush.msra.mxu0 0.0
    %650 = vmatpush.msra.mxu0 0.0
    %651 = vmatpush.msra.mxu0 0.0
    %652 = vmatpush.msra.mxu0 0.0
    %653 = vmatpush.msra.mxu0 0.0
    %654 = vmatpush.msra.mxu0 0.0
    %655 = vmatpush.msra.mxu0 0.0
    %656 = vmatpush.msra.mxu0 0.0
    %657 = vmatpush.msra.mxu0 0.0
    %658 = vmatpush.msra.mxu0 0.0
    %659 = vmatpush.msra.mxu0 0.0
    %660 = vmatpush.msra.mxu0 %v129
    %661 = vmatmul.f32.gmra.mxu0 %v643
    %v662 = vpop.f32.mrf.mxu0
    %v663 = vadd.f32 %v640, %v662
    %664 = vdwg.mxu0
    %665 = vrot.lane.b32.xlu0 %v128, 112
    %v666 = vpop.permute.xlu0 %665
    %667 = vrot.lane.b32.xlu0 %v128, 80
    %v668 = vpop.permute.xlu0 %667
    %v669 = vsel %vm137, %v666, 0
    %v671 = vsel %vm137, %v668, 0
    %673 = vmatpush.xpose.msra.mxu0 0.0
    %674 = vmatpush.xpose.msra.mxu0 0.0
    %675 = vmatpush.xpose.msra.mxu0 0.0
    %676 = vmatpush.xpose.msra.mxu0 0.0
    %677 = vmatpush.xpose.msra.mxu0 0.0
    %678 = vmatpush.xpose.msra.mxu0 0.0
    %679 = vmatpush.xpose.msra.mxu0 0.0
    %680 = vmatpush.xpose.msra.mxu0 0.0
    %681 = vmatpush.xpose.msra.mxu0 0.0
    %682 = vmatpush.xpose.msra.mxu0 0.0
    %683 = vmatpush.xpose.msra.mxu0 0.0
    %684 = vmatpush.xpose.msra.mxu0 0.0
    %685 = vmatpush.xpose.msra.mxu0 0.0
    %686 = vmatpush.xpose.msra.mxu0 0.0
    %687 = vmatpush.xpose.msra.mxu0 0.0
    %688 = vmatpush.xpose.msra.mxu0 %v671
    %689 = vmatmul.f32.gmra.mxu0 %v669
    %v690 = vpop.f32.mrf.mxu0
    %v691 = vadd.f32 0.0, %v690
    %692 = vdwg.mxu0
    %v693 = vsel %vm137, %v691, -inf
    %694 = vmax.xlane.f32.xlu0 %v693
    %v695 = vpop.xlane.xlu0 %694
    %v696 = vsub.f32 %v691, %v695
    %v697 = vmul.f32 %v696, 1.442695
    %v698 = vpow.pop %v697
    %v699 = vsel %vm137, %v698, 0.0
    %700 = vadd.xlane.f32.xlu0 %v699
    %v701 = vpop.xlane.xlu0 %700
    %v702 = vrcp.pop %v701
    %v703 = vmul.f32 %v698, %v702
    %704 = vrot.lane.b32.xlu0 %v79, 48
    %v705 = vpop.permute.xlu0 %704
    %v708 = vsel %vm137, %v703, 0
    %710 = vmatpush.msra.mxu0 0.0
    %711 = vmatpush.msra.mxu0 0.0
    %712 = vmatpush.msra.mxu0 0.0
    %713 = vmatpush.msra.mxu0 0.0
    %714 = vmatpush.msra.mxu0 0.0
    %715 = vmatpush.msra.mxu0 0.0
    %716 = vmatpush.msra.mxu0 0.0
    %717 = vmatpush.msra.mxu0 0.0
    %718 = vmatpush.msra.mxu0 0.0
    %719 = vmatpush.msra.mxu0 0.0
    %720 = vmatpush.msra.mxu0 0.0
    %721 = vmatpush.msra.mxu0 0.0
    %722 = vmatpush.msra.mxu0 0.0
    %723 = vmatpush.msra.mxu0 0.0
    %724 = vmatpush.msra.mxu0 0.0
    %725 = vmatpush.msra.mxu0 %v705
    %726 = vmatmul.f32.gmra.mxu0 %v708
    %v727 = vpop.f32.mrf.mxu0
    %v728 = vadd.f32 0.0, %v727
    %729 = vdwg.mxu0
    %v731 = vsel %vm137, %v728, 0
    %733 = vmatpush.msra.mxu0 0.0
    %734 = vmatpush.msra.mxu0 0.0
    %735 = vmatpush.msra.mxu0 0.0
    %736 = vmatpush.msra.mxu0 0.0
    %737 = vmatpush.msra.mxu0 0.0
    %738 = vmatpush.msra.mxu0 0.0
    %739 = vmatpush.msra.mxu0 0.0
    %740 = vmatpush.msra.mxu0 0.0
    %741 = vmatpush.msra.mxu0 0.0
    %742 = vmatpush.msra.mxu0 0.0
    %743 = vmatpush.msra.mxu0 0.0
    %744 = vmatpush.msra.mxu0 0.0
    %745 = vmatpush.msra.mxu0 0.0
    %746 = vmatpush.msra.mxu0 0.0
    %747 = vmatpush.msra.mxu0 0.0
    %748 = vmatpush.msra.mxu0 %v131
    %749 = vmatmul.f32.gmra.mxu0 %v731
    %v750 = vpop.f32.mrf.mxu0
    %v751 = vadd.f32 0.0, %v750
    %752 = vdwg.mxu0
    %v753 = vadd.f32 %v663, %v751
    %754 = vrot.lane.b32.xlu0 %v128, 104
    %v755 = vpop.permute.xlu0 %754
    %756 = vrot.lane.b32.xlu0 %v128, 72
    %v757 = vpop.permute.xlu0 %756
    %v758 = vsel %vm137, %v755, 0
    %v760 = vsel %vm137, %v757, 0
    %762 = vmatpush.xpose.msra.mxu0 0.0
    %763 = vmatpush.xpose.msra.mxu0 0.0
    %764 = vmatpush.xpose.msra.mxu0 0.0
    %765 = vmatpush.xpose.msra.mxu0 0.0
    %766 = vmatpush.xpose.msra.mxu0 0.0
    %767 = vmatpush.xpose.msra.mxu0 0.0
    %768 = vmatpush.xpose.msra.mxu0 0.0
    %769 = vmatpush.xpose.msra.mxu0 0.0
    %770 = vmatpush.xpose.msra.mxu0 0.0
    %771 = vmatpush.xpose.msra.mxu0 0.0
    %772 = vmatpush.xpose.msra.mxu0 0.0
    %773 = vmatpush.xpose.msra.mxu0 0.0
    %774 = vmatpush.xpose.msra.mxu0 0.0
    %775 = vmatpush.xpose.msra.mxu0 0.0
    %776 = vmatpush.xpose.msra.mxu0 0.0
    %777 = vmatpush.xpose.msra.mxu0 %v760
    %778 = vmatmul.f32.gmra.mxu0 %v758
    %v779 = vpop.f32.mrf.mxu0
    %v780 = vadd.f32 0.0, %v779
    %781 = vdwg.mxu0
    %v782 = vsel %vm137, %v780, -inf
    %783 = vmax.xlane.f32.xlu0 %v782
    %v784 = vpop.xlane.xlu0 %783
    %v785 = vsub.f32 %v780, %v784
    %v786 = vmul.f32 %v785, 1.442695
    %v787 = vpow.pop %v786
    %v788 = vsel %vm137, %v787, 0.0
    %789 = vadd.xlane.f32.xlu0 %v788
    %v790 = vpop.xlane.xlu0 %789
    %v791 = vrcp.pop %v790
    %v792 = vmul.f32 %v787, %v791
    %793 = vrot.lane.b32.xlu0 %v79, 40
    %v794 = vpop.permute.xlu0 %793
    %v797 = vsel %vm137, %v792, 0
    %799 = vmatpush.msra.mxu0 0.0
    %800 = vmatpush.msra.mxu0 0.0
    %801 = vmatpush.msra.mxu0 0.0
    %802 = vmatpush.msra.mxu0 0.0
    %803 = vmatpush.msra.mxu0 0.0
    %804 = vmatpush.msra.mxu0 0.0
    %805 = vmatpush.msra.mxu0 0.0
    %806 = vmatpush.msra.mxu0 0.0
    %807 = vmatpush.msra.mxu0 0.0
    %808 = vmatpush.msra.mxu0 0.0
    %809 = vmatpush.msra.mxu0 0.0
    %810 = vmatpush.msra.mxu0 0.0
    %811 = vmatpush.msra.mxu0 0.0
    %812 = vmatpush.msra.mxu0 0.0
    %813 = vmatpush.msra.mxu0 0.0
    %814 = vmatpush.msra.mxu0 %v794
    %815 = vmatmul.f32.gmra.mxu0 %v797
    %v816 = vpop.f32.mrf.mxu0
    %v817 = vadd.f32 0.0, %v816
    %818 = vdwg.mxu0
    %v820 = vsel %vm137, %v817, 0
    %822 = vmatpush.msra.mxu0 0.0
    %823 = vmatpush.msra.mxu0 0.0
    %824 = vmatpush.msra.mxu0 0.0
    %825 = vmatpush.msra.mxu0 0.0
    %826 = vmatpush.msra.mxu0 0.0
    %827 = vmatpush.msra.mxu0 0.0
    %828 = vmatpush.msra.mxu0 0.0
    %829 = vmatpush.msra.mxu0 0.0
    %830 = vmatpush.msra.mxu0 0.0
    %831 = vmatpush.msra.mxu0 0.0
    %832 = vmatpush.msra.mxu0 0.0
    %833 = vmatpush.msra.mxu0 0.0
    %834 = vmatpush.msra.mxu0 0.0
    %835 = vmatpush.msra.mxu0 0.0
    %836 = vmatpush.msra.mxu0 0.0
    %837 = vmatpush.msra.mxu0 %v132
    %838 = vmatmul.f32.gmra.mxu0 %v820
    %v839 = vpop.f32.mrf.mxu0
    %v840 = vadd.f32 0.0, %v839
    %841 = vdwg.mxu0
    %v842 = vadd.f32 %v753, %v840
    %v843 = vadd.f32 %v842, %v488
    %vm844 = vcmask 261120
    %845 = vst.msk [vmem:[#allocation7] sm:$0xff] %vm844, %v489
    %846 = vst.msk [vmem:[#allocation7 + $0x8] sm:$0xff] %vm844, %v843
    // Predicated region
    $region18: #{tpu_custom_call.1} parent=1 // pred_check
      _
    $region19: #{tpu_custom_call.1} parent=1 // pred_check_branch
      %848 = sbr.rel (0) target = $region21
    $region20: #{tpu_custom_call.1} parent=1 // pred_region
      %850 = vsyncadd [#allocation4], 0
      %s851 = sshll.u32 [#allocation7], 4
      %s852 = int_to_ptr.vmem [resolvable:$true] %s851
      %s853 = sshll.u32 %s2, 4
      %s854 = int_to_ptr.hbm [resolvable:$true] %s853
      %859 = dma.vmem_to_hbm [thread:$0]  %s852, 256, %s854, [#allocation4], 128, 128, 8
    $region21: #{tpu_custom_call.1} parent=1 // pred_fallthru
      _
    // Predicated region
    $region22: #{tpu_custom_call.1} parent=1 // pred_check
      _
    $region23: #{tpu_custom_call.1} parent=1 // pred_check_branch
      %861 = sbr.rel (0) target = $region25
    $region24: #{tpu_custom_call.1} parent=1 // pred_region
      %863 = dma.done [#allocation4], 256
    $region25: #{tpu_custom_call.1} parent=1 // pred_fallthru
      _
    %864 = vsyncpa [#allocation3], 1
    %865 = vsyncpa [#allocation6], 1
    %866 = vsyncpa [#allocation4], 1

</llo_original>
